<compile_context>
chip_gen: v5e
topology: v5e:2x2
jax: 0.10.0
libtpu: 0.0.40
codegen_flags: <defaults>
</compile_context>

<pallas_src>
import functools
import math

import jax
import jax.numpy as jnp
from jax.experimental import pallas as pl
from jax.experimental.pallas import tpu as pltpu

# ----------------------- model hyper-parameters (small) ----------------------
NUM_HUMANS = 2
NUM_CLASSES = 5
NUM_ACTIONS = 6
NUM_QUERIES = 8
HIDDEN_DIM = 32          # transformer.d_model
BACKBONE_CHANNELS = 64   # backbone.num_channels
BATCH = 2
FEAT_H = 8
FEAT_W = 8

NCLS = (NUM_HUMANS + 1) + (NUM_CLASSES + 1) + (NUM_ACTIONS + 1)   # 3 + 6 + 7 = 16
NBOX = 8                                                          # human(4) + object(4)
BIAS_LANES = 128                                                  # one-vreg bias pack


# ------------------------------ fused Pallas kernel ---------------------------
def _hoitr_kernel(src_ref, pos_ref, nmask_ref, qe_ref,
                  wproj_ref, wattn_ref, whead0_ref, wbox1_ref, wbox2_ref,
                  bias_ref, out_ref, *, n_batch, seq, d, n_q, n_cls):
    f32 = jnp.float32

    biases = bias_ref[...]                     # [8, 128] single DMA, one vreg
    b_proj = biases[0:1, :d]
    b_q = biases[1:2, :d]                      # scale already baked in
    b_k = biases[2:3, :d]
    b_v = biases[3:4, :d]
    b_o = biases[4:5, :d]
    b_h0 = biases[5:6, :n_cls + 2 * d]         # [1, 80]
    b_b1 = biases[6:7, :2 * d]                 # [1, 64]
    b_b2 = biases[7:8, :NBOX]                  # [1, 8]

    # --- input_proj: 1x1 Conv2d == channel matmul over the fused [B*S, C] slab
    mem = jnp.dot(src_ref[...], wproj_ref[...],
                  preferred_element_type=f32) + b_proj                       # [B*S, d]

    wattn = wattn_ref[...]                     # [4d, d] sublane-stacked q|k|v|o
    wq = wattn[0 * d:1 * d]
    wk = wattn[1 * d:2 * d]
    wv = wattn[2 * d:3 * d]
    wo = wattn[3 * d:4 * d]

    # --- transformer stand-in: single masked cross-attention decode -----------
    # TODO(synk): self.transformer is an external DETR encoder/decoder stack not
    # defined in this module; stand-in keeps the same (memory, mask, query_embed,
    # pos) interface.
    qh = jnp.dot(qe_ref[...], wq, preferred_element_type=f32) + b_q          # [Q, d]
    kh = jnp.dot(mem + pos_ref[...], wk, preferred_element_type=f32) + b_k   # [B*S, d]
    vh = jnp.dot(mem, wv, preferred_element_type=f32) + b_v                  # [B*S, d]

    nmask = nmask_ref[...]                     # [B*Q, S] additive (-1e9 on pad)

    attn_rows = []
    for b in range(n_batch):                   # static 2-iteration loop
        kh_b = kh[b * seq:(b + 1) * seq]       # sublane-aligned slice [S, d]
        vh_b = vh[b * seq:(b + 1) * seq]
        # scores: contract on feature dim (no explicit K transpose)
        s = jax.lax.dot_general(qh, kh_b, (((1,), (1,)), ((), ())),
                                preferred_element_type=f32)                  # [Q, S]
        s = s + nmask[b * n_q:(b + 1) * n_q]
        m = jnp.max(s, axis=-1, keepdims=True)
        p = jnp.exp(s - m)
        p = p * pl.reciprocal(jnp.sum(p, axis=-1, keepdims=True), approx=True)
        attn_rows.append(jnp.dot(p, vh_b, preferred_element_type=f32))       # [Q, d]
    attn = jnp.concatenate(attn_rows, axis=0)                                # [B*Q, d]
    hs = jnp.dot(attn, wo, preferred_element_type=f32) + b_o                 # [B*Q, d]

    # --- heads: one packed matmul [cls(16) | human box l0(32) | object box l0(32)]
    big0 = jnp.dot(hs, whead0_ref[...], preferred_element_type=f32) + b_h0   # [B*Q, 80]
    cls = big0[:, :n_cls]                                                    # [B*Q, 16]
    h0 = jnp.maximum(big0[:, n_cls:], 0.0)                                   # [B*Q, 64]
    h1 = jnp.maximum(
        jnp.dot(h0, wbox1_ref[...], preferred_element_type=f32) + b_b1, 0.0)  # [B*Q, 64]
    boxes = jax.nn.sigmoid(
        jnp.dot(h1, wbox2_ref[...], preferred_element_type=f32) + b_b2)       # [B*Q, 8]

    # single lane-packed store: [cls(16) | hbox(4) | obox(4)]
    out_ref[...] = jnp.concatenate([cls, boxes], axis=-1)


# ----------------------------- parameter init --------------------------------
def _uniform(key, shape, bound):
    return jax.random.uniform(key, shape, jnp.float32, -bound, bound)


def _init_linear(key, fan_in, fan_out):
    # Matches torch.nn.Linear default init (uniform +- 1/sqrt(fan_in)); weight
    # stored already transposed to [fan_in, fan_out] for x @ w.
    kw, kb = jax.random.split(key)
    bound = 1.0 / math.sqrt(fan_in)
    return _uniform(kw, (fan_in, fan_out), bound), _uniform(kb, (fan_out,), bound)


def init_params(key):
    keys = jax.random.split(key, 20)
    p = {"hidden_dim": HIDDEN_DIM}
    d = HIDDEN_DIM

    # nn.Embedding(num_queries, hidden_dim): weight ~ N(0, 1)
    p["query_embed"] = jax.random.normal(keys[0], (NUM_QUERIES, d), jnp.float32)
    # nn.Conv2d(backbone.num_channels, hidden_dim, kernel_size=1) -> matmul [C, d]
    p["input_proj_w"], p["input_proj_b"] = _init_linear(keys[1], BACKBONE_CHANNELS, d)

    # stand-in single cross-attention projections (q/k/v/out), all [d, d]
    p["attn_wq"], p["attn_bq"] = _init_linear(keys[2], d, d)
    p["attn_wk"], p["attn_bk"] = _init_linear(keys[3], d, d)
    p["attn_wv"], p["attn_bv"] = _init_linear(keys[4], d, d)
    p["attn_wo"], p["attn_bo"] = _init_linear(keys[5], d, d)

    # heads
    p["human_cls_w"], p["human_cls_b"] = _init_linear(keys[6], d, NUM_HUMANS + 1)
    p["object_cls_w"], p["object_cls_b"] = _init_linear(keys[7], d, NUM_CLASSES + 1)
    p["action_cls_w"], p["action_cls_b"] = _init_linear(keys[8], d, NUM_ACTIONS + 1)

    def init_mlp(k):
        k0, k1, k2 = jax.random.split(k, 3)
        w0, b0 = _init_linear(k0, d, d)
        w1, b1 = _init_linear(k1, d, d)
        w2, b2 = _init_linear(k2, d, 4)
        return {"w0": w0, "b0": b0, "w1": w1, "b1": b1, "w2": w2, "b2": b2}

    p["human_box_mlp"] = init_mlp(keys[9])
    p["object_box_mlp"] = init_mlp(keys[10])
    return p


# ------------------------------- forward pass --------------------------------
def hoitr_forward(params, src, mask, pos):
    """src: [B, C, H, W] (NCHW backbone features), mask: [B, H, W] bool (1 on
    padded pixels), pos: [B, hidden, H, W] (NCHW positional encoding)."""
    B, C, H, W = src.shape
    d = params["hidden_dim"]
    S = H * W
    Q = NUM_QUERIES
    f32 = jnp.float32

    # --- one-time layout plumbing (plain XLA ops outside the kernel) ----------
    src_f = jnp.transpose(src, (0, 2, 3, 1)).reshape(B * S, C).astype(f32)
    pos_f = jnp.transpose(pos, (0, 2, 3, 1)).reshape(B * S, d).astype(f32)
    # additive key-padding mask, replicated per query row
    nmask = jnp.broadcast_to(mask.reshape(B, 1, S).astype(f32) * (-1e9),
                             (B, Q, S)).reshape(B * Q, S)

    # --- weight packing (fewer, wider arrays / matmuls) -----------------------
    scale = 1.0 / math.sqrt(d)
    w_attn = jnp.concatenate([params["attn_wq"] * scale, params["attn_wk"],
                              params["attn_wv"], params["attn_wo"]], axis=0)    # [4d, d]

    wcls = jnp.concatenate([params["human_cls_w"], params["object_cls_w"],
                            params["action_cls_w"]], axis=1)                    # [d, 16]
    bcls = jnp.concatenate([params["human_cls_b"], params["object_cls_b"],
                            params["action_cls_b"]], axis=0)
    hm = params["human_box_mlp"]
    om = params["object_box_mlp"]
    w_head0 = jnp.concatenate([wcls, hm["w0"], om["w0"]], axis=1)               # [d, 80]
    b_head0 = jnp.concatenate([bcls, hm["b0"], om["b0"]], axis=0)               # [80]

    zdd = jnp.zeros((d, d), f32)
    w_box1 = jnp.concatenate([jnp.concatenate([hm["w1"], zdd], axis=1),
                              jnp.concatenate([zdd, om["w1"]], axis=1)], axis=0)  # [2d, 2d]
    b_box1 = jnp.concatenate([hm["b1"], om["b1"]], axis=0)                        # [64]
    zd4 = jnp.zeros((d, 4), f32)
    w_box2 = jnp.concatenate([jnp.concatenate([hm["w2"], zd4], axis=1),
                              jnp.concatenate([zd4, om["w2"]], axis=1)], axis=0)  # [2d, 8]
    b_box2 = jnp.concatenate([hm["b2"], om["b2"]], axis=0)                        # [8]

    pad = lambda v: jnp.pad(v, (0, BIAS_LANES - v.shape[0]))
    bias_pack = jnp.stack([
        pad(params["input_proj_b"]),
        pad(params["attn_bq"] * scale), pad(params["attn_bk"]),
        pad(params["attn_bv"]), pad(params["attn_bo"]),
        pad(b_head0), pad(b_box1), pad(b_box2)])                                  # [8, 128]

    inputs = [src_f, pos_f, nmask, params["query_embed"],
              params["input_proj_w"], w_attn, w_head0, w_box1, w_box2, bias_pack]
    # single grid step; every input is a full-array (2D) block resident in VMEM
    in_specs = [pl.BlockSpec(a.shape, lambda i: (0, 0)) for a in inputs]

    packed = pl.pallas_call(
        functools.partial(_hoitr_kernel, n_batch=B, seq=S, d=d, n_q=Q, n_cls=NCLS),
        out_shape=jax.ShapeDtypeStruct((B * Q, NCLS + NBOX), f32),
        grid=(1,),
        in_specs=in_specs,
        out_specs=pl.BlockSpec((B * Q, NCLS + NBOX), lambda i: (0, 0)),
        compiler_params=pltpu.CompilerParams(dimension_semantics=("arbitrary",)),
    )(*inputs)

    packed = packed.reshape(B, Q, NCLS + NBOX)
    n_h = NUM_HUMANS + 1
    n_o = NUM_CLASSES + 1
    out = {
        "human_pred_logits": packed[..., :n_h],
        "object_pred_logits": packed[..., n_h:n_h + n_o],
        "action_pred_logits": packed[..., n_h + n_o:NCLS],
        "human_pred_boxes": packed[..., NCLS:NCLS + 4],
        "object_pred_boxes": packed[..., NCLS + 4:],
    }
    # TODO(synk): aux_loss branch omitted (only one stand-in decoder layer here).
    return out


# ----------------------------------- main -------------------------------------
if __name__ == "__main__":
    key = jax.random.PRNGKey(0)
    k_param, k_src, k_pos = jax.random.split(key, 3)

    params = init_params(k_param)

    src = jax.random.normal(k_src, (BATCH, BACKBONE_CHANNELS, FEAT_H, FEAT_W),
                            jnp.float32)
    mask = jnp.zeros((BATCH, FEAT_H, FEAT_W), jnp.bool_)          # no padded pixels
    pos = jax.random.normal(k_pos, (BATCH, HIDDEN_DIM, FEAT_H, FEAT_W), jnp.float32)

    out = hoitr_forward(params, src, mask, pos)
    jax.block_until_ready(out)

    assert out["human_pred_logits"].shape == (BATCH, NUM_QUERIES, NUM_HUMANS + 1)
    assert out["human_pred_boxes"].shape == (BATCH, NUM_QUERIES, 4)
    assert out["object_pred_logits"].shape == (BATCH, NUM_QUERIES, NUM_CLASSES + 1)
    assert out["object_pred_boxes"].shape == (BATCH, NUM_QUERIES, 4)
    assert out["action_pred_logits"].shape == (BATCH, NUM_QUERIES, NUM_ACTIONS + 1)
    assert bool(jnp.all(out["human_pred_boxes"] >= 0) & jnp.all(out["human_pred_boxes"] <= 1))
    assert bool(jnp.all(out["object_pred_boxes"] >= 0) & jnp.all(out["object_pred_boxes"] <= 1))
    assert bool(jnp.all(jnp.isfinite(out["action_pred_logits"])))

    print("KERNEL_OK")
</pallas_src>

<mosaic_0001>
module attributes {stable_mosaic.version = 11 : i64} {
  func.func @_hoitr_kernel(%arg0: i32, %arg1: memref<128x64xf32, #tpu.memory_space<vmem>>, %arg2: memref<128x32xf32, #tpu.memory_space<vmem>>, %arg3: memref<16x64xf32, #tpu.memory_space<vmem>>, %arg4: memref<8x32xf32, #tpu.memory_space<vmem>>, %arg5: memref<64x32xf32, #tpu.memory_space<vmem>>, %arg6: memref<128x32xf32, #tpu.memory_space<vmem>>, %arg7: memref<32x80xf32, #tpu.memory_space<vmem>>, %arg8: memref<64x64xf32, #tpu.memory_space<vmem>>, %arg9: memref<64x8xf32, #tpu.memory_space<vmem>>, %arg10: memref<8x128xf32, #tpu.memory_space<vmem>>, %arg11: memref<16x24xf32, #tpu.memory_space<vmem>>) attributes {dimension_semantics = [#tpu.dimension_semantics<arbitrary>], iteration_bounds = array<i64: 1>, scalar_prefetch = 0 : i64, scratch_operands = 0 : i64, tpu.core_type = #tpu.core_type<tc>, window_params = [{pipeline_mode = #tpu.pipeline_mode<synchronous>, transform_indices = @transform_0, window_bounds = array<i64: 128, 64>}, {pipeline_mode = #tpu.pipeline_mode<synchronous>, transform_indices = @transform_1, window_bounds = array<i64: 128, 32>}, {pipeline_mode = #tpu.pipeline_mode<synchronous>, transform_indices = @transform_2, window_bounds = array<i64: 16, 64>}, {pipeline_mode = #tpu.pipeline_mode<synchronous>, transform_indices = @transform_3, window_bounds = array<i64: 8, 32>}, {pipeline_mode = #tpu.pipeline_mode<synchronous>, transform_indices = @transform_4, window_bounds = array<i64: 64, 32>}, {pipeline_mode = #tpu.pipeline_mode<synchronous>, transform_indices = @transform_5, window_bounds = array<i64: 128, 32>}, {pipeline_mode = #tpu.pipeline_mode<synchronous>, transform_indices = @transform_6, window_bounds = array<i64: 32, 80>}, {pipeline_mode = #tpu.pipeline_mode<synchronous>, transform_indices = @transform_7, window_bounds = array<i64: 64, 64>}, {pipeline_mode = #tpu.pipeline_mode<synchronous>, transform_indices = @transform_8, window_bounds = array<i64: 64, 8>}, {pipeline_mode = #tpu.pipeline_mode<synchronous>, transform_indices = @transform_9, window_bounds = array<i64: 8, 128>}, {pipeline_mode = #tpu.pipeline_mode<synchronous>, transform_indices = @transform_10, window_bounds = array<i64: 16, 24>}]} {
    %c0 = arith.constant 0 : index
    %c0_0 = arith.constant 0 : index
    %0 = vector.load %arg10[%c0, %c0_0] : memref<8x128xf32, #tpu.memory_space<vmem>>, vector<8x128xf32>
    %1 = vector.extract_strided_slice %0 {offsets = [0, 0], sizes = [1, 32], strides = [1, 1]} : vector<8x128xf32> to vector<1x32xf32>
    %2 = vector.extract_strided_slice %0 {offsets = [1, 0], sizes = [1, 32], strides = [1, 1]} : vector<8x128xf32> to vector<1x32xf32>
    %3 = vector.extract_strided_slice %0 {offsets = [2, 0], sizes = [1, 32], strides = [1, 1]} : vector<8x128xf32> to vector<1x32xf32>
    %4 = vector.extract_strided_slice %0 {offsets = [3, 0], sizes = [1, 32], strides = [1, 1]} : vector<8x128xf32> to vector<1x32xf32>
    %5 = vector.extract_strided_slice %0 {offsets = [4, 0], sizes = [1, 32], strides = [1, 1]} : vector<8x128xf32> to vector<1x32xf32>
    %6 = vector.extract_strided_slice %0 {offsets = [5, 0], sizes = [1, 80], strides = [1, 1]} : vector<8x128xf32> to vector<1x80xf32>
    %7 = vector.extract_strided_slice %0 {offsets = [6, 0], sizes = [1, 64], strides = [1, 1]} : vector<8x128xf32> to vector<1x64xf32>
    %8 = vector.extract_strided_slice %0 {offsets = [7, 0], sizes = [1, 8], strides = [1, 1]} : vector<8x128xf32> to vector<1x8xf32>
    %c0_1 = arith.constant 0 : index
    %c0_2 = arith.constant 0 : index
    %9 = vector.load %arg1[%c0_1, %c0_2] : memref<128x64xf32, #tpu.memory_space<vmem>>, vector<128x64xf32>
    %c0_3 = arith.constant 0 : index
    %c0_4 = arith.constant 0 : index
    %10 = vector.load %arg5[%c0_3, %c0_4] : memref<64x32xf32, #tpu.memory_space<vmem>>, vector<64x32xf32>
    %cst = arith.constant dense<0.000000e+00> : vector<128x32xf32>
    %11 = tpu.matmul %9, %10, %cst {dimension_numbers = #tpu.dot_dimension_numbers<[1], [0], [0], [1], [0, 0, 1, 1], [], []>} : vector<128x64xf32>, vector<64x32xf32>, vector<128x32xf32> -> vector<128x32xf32>
    %12 = vector.broadcast %1 : vector<1x32xf32> to vector<128x32xf32>
    %13 = arith.addf %11, %12 : vector<128x32xf32>
    %c0_5 = arith.constant 0 : index
    %c0_6 = arith.constant 0 : index
    %14 = vector.load %arg6[%c0_5, %c0_6] : memref<128x32xf32, #tpu.memory_space<vmem>>, vector<128x32xf32>
    %15 = vector.extract_strided_slice %14 {offsets = [0, 0], sizes = [32, 32], strides = [1, 1]} : vector<128x32xf32> to vector<32x32xf32>
    %16 = vector.extract_strided_slice %14 {offsets = [32, 0], sizes = [32, 32], strides = [1, 1]} : vector<128x32xf32> to vector<32x32xf32>
    %17 = vector.extract_strided_slice %14 {offsets = [64, 0], sizes = [32, 32], strides = [1, 1]} : vector<128x32xf32> to vector<32x32xf32>
    %18 = vector.extract_strided_slice %14 {offsets = [96, 0], sizes = [32, 32], strides = [1, 1]} : vector<128x32xf32> to vector<32x32xf32>
    %c0_7 = arith.constant 0 : index
    %c0_8 = arith.constant 0 : index
    %19 = vector.load %arg4[%c0_7, %c0_8] : memref<8x32xf32, #tpu.memory_space<vmem>>, vector<8x32xf32>
    %cst_9 = arith.constant dense<0.000000e+00> : vector<8x32xf32>
    %20 = tpu.matmul %19, %15, %cst_9 {dimension_numbers = #tpu.dot_dimension_numbers<[1], [0], [0], [1], [0, 0, 1, 1], [], []>} : vector<8x32xf32>, vector<32x32xf32>, vector<8x32xf32> -> vector<8x32xf32>
    %21 = vector.broadcast %2 : vector<1x32xf32> to vector<8x32xf32>
    %22 = arith.addf %20, %21 : vector<8x32xf32>
    %c0_10 = arith.constant 0 : index
    %c0_11 = arith.constant 0 : index
    %23 = vector.load %arg2[%c0_10, %c0_11] : memref<128x32xf32, #tpu.memory_space<vmem>>, vector<128x32xf32>
    %24 = arith.addf %13, %23 : vector<128x32xf32>
    %cst_12 = arith.constant dense<0.000000e+00> : vector<128x32xf32>
    %25 = tpu.matmul %24, %16, %cst_12 {dimension_numbers = #tpu.dot_dimension_numbers<[1], [0], [0], [1], [0, 0, 1, 1], [], []>} : vector<128x32xf32>, vector<32x32xf32>, vector<128x32xf32> -> vector<128x32xf32>
    %26 = vector.broadcast %3 : vector<1x32xf32> to vector<128x32xf32>
    %27 = arith.addf %25, %26 : vector<128x32xf32>
    %cst_13 = arith.constant dense<0.000000e+00> : vector<128x32xf32>
    %28 = tpu.matmul %13, %17, %cst_13 {dimension_numbers = #tpu.dot_dimension_numbers<[1], [0], [0], [1], [0, 0, 1, 1], [], []>} : vector<128x32xf32>, vector<32x32xf32>, vector<128x32xf32> -> vector<128x32xf32>
    %29 = vector.broadcast %4 : vector<1x32xf32> to vector<128x32xf32>
    %30 = arith.addf %28, %29 : vector<128x32xf32>
    %c0_14 = arith.constant 0 : index
    %c0_15 = arith.constant 0 : index
    %31 = vector.load %arg3[%c0_14, %c0_15] : memref<16x64xf32, #tpu.memory_space<vmem>>, vector<16x64xf32>
    %32 = vector.extract_strided_slice %27 {offsets = [0, 0], sizes = [64, 32], strides = [1, 1]} : vector<128x32xf32> to vector<64x32xf32>
    %33 = vector.extract_strided_slice %30 {offsets = [0, 0], sizes = [64, 32], strides = [1, 1]} : vector<128x32xf32> to vector<64x32xf32>
    %cst_16 = arith.constant dense<0.000000e+00> : vector<8x64xf32>
    %34 = tpu.matmul %22, %32, %cst_16 {dimension_numbers = #tpu.dot_dimension_numbers<[1], [1], [0], [0], [0, 0, 1, 0], [], []>} : vector<8x32xf32>, vector<64x32xf32>, vector<8x64xf32> -> vector<8x64xf32>
    %35 = vector.extract_strided_slice %31 {offsets = [0, 0], sizes = [8, 64], strides = [1, 1]} : vector<16x64xf32> to vector<8x64xf32>
    %36 = arith.addf %34, %35 : vector<8x64xf32>
    %cst_17 = arith.constant dense<0xFF800000> : vector<8xf32>
    %37 = vector.multi_reduction <maximumf>, %36, %cst_17 [1] : vector<8x64xf32> to vector<8xf32>
    %38 = vector.shape_cast %37 : vector<8xf32> to vector<8x1xf32>
    %39 = vector.broadcast %38 : vector<8x1xf32> to vector<8x64xf32>
    %40 = arith.subf %36, %39 : vector<8x64xf32>
    %41 = math.exp %40 : vector<8x64xf32>
    %cst_18 = arith.constant dense<0.000000e+00> : vector<8xf32>
    %42 = vector.multi_reduction <add>, %41, %cst_18 [1] : vector<8x64xf32> to vector<8xf32>
    %43 = vector.shape_cast %42 : vector<8xf32> to vector<8x1xf32>
    %44 = tpu.reciprocal %43 {approx = true} : vector<8x1xf32> -> vector<8x1xf32>
    %45 = vector.broadcast %44 : vector<8x1xf32> to vector<8x64xf32>
    %46 = arith.mulf %41, %45 : vector<8x64xf32>
    %cst_19 = arith.constant dense<0.000000e+00> : vector<8x32xf32>
    %47 = tpu.matmul %46, %33, %cst_19 {dimension_numbers = #tpu.dot_dimension_numbers<[1], [0], [0], [1], [0, 0, 1, 1], [], []>} : vector<8x64xf32>, vector<64x32xf32>, vector<8x32xf32> -> vector<8x32xf32>
    %48 = vector.extract_strided_slice %27 {offsets = [64, 0], sizes = [64, 32], strides = [1, 1]} : vector<128x32xf32> to vector<64x32xf32>
    %49 = vector.extract_strided_slice %30 {offsets = [64, 0], sizes = [64, 32], strides = [1, 1]} : vector<128x32xf32> to vector<64x32xf32>
    %cst_20 = arith.constant dense<0.000000e+00> : vector<8x64xf32>
    %50 = tpu.matmul %22, %48, %cst_20 {dimension_numbers = #tpu.dot_dimension_numbers<[1], [1], [0], [0], [0, 0, 1, 0], [], []>} : vector<8x32xf32>, vector<64x32xf32>, vector<8x64xf32> -> vector<8x64xf32>
    %51 = vector.extract_strided_slice %31 {offsets = [8, 0], sizes = [8, 64], strides = [1, 1]} : vector<16x64xf32> to vector<8x64xf32>
    %52 = arith.addf %50, %51 : vector<8x64xf32>
    %cst_21 = arith.constant dense<0xFF800000> : vector<8xf32>
    %53 = vector.multi_reduction <maximumf>, %52, %cst_21 [1] : vector<8x64xf32> to vector<8xf32>
    %54 = vector.shape_cast %53 : vector<8xf32> to vector<8x1xf32>
    %55 = vector.broadcast %54 : vector<8x1xf32> to vector<8x64xf32>
    %56 = arith.subf %52, %55 : vector<8x64xf32>
    %57 = math.exp %56 : vector<8x64xf32>
    %cst_22 = arith.constant dense<0.000000e+00> : vector<8xf32>
    %58 = vector.multi_reduction <add>, %57, %cst_22 [1] : vector<8x64xf32> to vector<8xf32>
    %59 = vector.shape_cast %58 : vector<8xf32> to vector<8x1xf32>
    %60 = tpu.reciprocal %59 {approx = true} : vector<8x1xf32> -> vector<8x1xf32>
    %61 = vector.broadcast %60 : vector<8x1xf32> to vector<8x64xf32>
    %62 = arith.mulf %57, %61 : vector<8x64xf32>
    %cst_23 = arith.constant dense<0.000000e+00> : vector<8x32xf32>
    %63 = tpu.matmul %62, %49, %cst_23 {dimension_numbers = #tpu.dot_dimension_numbers<[1], [0], [0], [1], [0, 0, 1, 1], [], []>} : vector<8x64xf32>, vector<64x32xf32>, vector<8x32xf32> -> vector<8x32xf32>
    %64 = tpu.concatenate %47, %63 in 0 : vector<8x32xf32>, vector<8x32xf32> -> vector<16x32xf32>
    %cst_24 = arith.constant dense<0.000000e+00> : vector<16x32xf32>
    %65 = tpu.matmul %64, %18, %cst_24 {dimension_numbers = #tpu.dot_dimension_numbers<[1], [0], [0], [1], [0, 0, 1, 1], [], []>} : vector<16x32xf32>, vector<32x32xf32>, vector<16x32xf32> -> vector<16x32xf32>
    %66 = vector.broadcast %5 : vector<1x32xf32> to vector<16x32xf32>
    %67 = arith.addf %65, %66 : vector<16x32xf32>
    %c0_25 = arith.constant 0 : index
    %c0_26 = arith.constant 0 : index
    %68 = vector.load %arg7[%c0_25, %c0_26] : memref<32x80xf32, #tpu.memory_space<vmem>>, vector<32x80xf32>
    %cst_27 = arith.constant dense<0.000000e+00> : vector<16x80xf32>
    %69 = tpu.matmul %67, %68, %cst_27 {dimension_numbers = #tpu.dot_dimension_numbers<[1], [0], [0], [1], [0, 0, 1, 1], [], []>} : vector<16x32xf32>, vector<32x80xf32>, vector<16x80xf32> -> vector<16x80xf32>
    %70 = vector.broadcast %6 : vector<1x80xf32> to vector<16x80xf32>
    %71 = arith.addf %69, %70 : vector<16x80xf32>
    %72 = vector.extract_strided_slice %71 {offsets = [0, 0], sizes = [16, 16], strides = [1, 1]} : vector<16x80xf32> to vector<16x16xf32>
    %73 = vector.extract_strided_slice %71 {offsets = [0, 16], sizes = [16, 64], strides = [1, 1]} : vector<16x80xf32> to vector<16x64xf32>
    %cst_28 = arith.constant 0.000000e+00 : f32
    %74 = vector.broadcast %cst_28 : f32 to vector<16x64xf32>
    %75 = arith.maximumf %73, %74 : vector<16x64xf32>
    %c0_29 = arith.constant 0 : index
    %c0_30 = arith.constant 0 : index
    %76 = vector.load %arg8[%c0_29, %c0_30] : memref<64x64xf32, #tpu.memory_space<vmem>>, vector<64x64xf32>
    %cst_31 = arith.constant dense<0.000000e+00> : vector<16x64xf32>
    %77 = tpu.matmul %75, %76, %cst_31 {dimension_numbers = #tpu.dot_dimension_numbers<[1], [0], [0], [1], [0, 0, 1, 1], [], []>} : vector<16x64xf32>, vector<64x64xf32>, vector<16x64xf32> -> vector<16x64xf32>
    %78 = vector.broadcast %7 : vector<1x64xf32> to vector<16x64xf32>
    %79 = arith.addf %77, %78 : vector<16x64xf32>
    %cst_32 = arith.constant 0.000000e+00 : f32
    %80 = vector.broadcast %cst_32 : f32 to vector<16x64xf32>
    %81 = arith.maximumf %79, %80 : vector<16x64xf32>
    %c0_33 = arith.constant 0 : index
    %c0_34 = arith.constant 0 : index
    %82 = vector.load %arg9[%c0_33, %c0_34] : memref<64x8xf32, #tpu.memory_space<vmem>>, vector<64x8xf32>
    %cst_35 = arith.constant dense<0.000000e+00> : vector<16x8xf32>
    %83 = tpu.matmul %81, %82, %cst_35 {dimension_numbers = #tpu.dot_dimension_numbers<[1], [0], [0], [1], [0, 0, 1, 1], [], []>} : vector<16x64xf32>, vector<64x8xf32>, vector<16x8xf32> -> vector<16x8xf32>
    %84 = vector.broadcast %8 : vector<1x8xf32> to vector<16x8xf32>
    %85 = arith.addf %83, %84 : vector<16x8xf32>
    %86 = arith.negf %85 : vector<16x8xf32>
    %87 = math.exp %86 : vector<16x8xf32>
    %cst_36 = arith.constant 1.000000e+00 : f32
    %88 = vector.broadcast %cst_36 : f32 to vector<16x8xf32>
    %89 = arith.addf %88, %87 : vector<16x8xf32>
    %90 = arith.divf %88, %89 : vector<16x8xf32>
    %91 = tpu.concatenate %72, %90 in 1 : vector<16x16xf32>, vector<16x8xf32> -> vector<16x24xf32>
    %c0_37 = arith.constant 0 : index
    %c0_38 = arith.constant 0 : index
    %92 = vector.load %arg11[%c0_37, %c0_38] : memref<16x24xf32, #tpu.memory_space<vmem>>, vector<16x24xf32>
    tpu.vector_store %arg11[%c0_37, %c0_38], %91 {strides = array<i32>} : memref<16x24xf32, #tpu.memory_space<vmem>>, vector<16x24xf32>,
    return
  }
  func.func @transform_0(%arg0: i32) -> (i32, i32) {
    %c0_i32 = arith.constant 0 : i32
    %c0_i32_0 = arith.constant 0 : i32
    %c0_i32_1 = arith.constant 0 : i32
    return %c0_i32, %c0_i32_0 : i32, i32
  }
  func.func @transform_1(%arg0: i32) -> (i32, i32) {
    %c0_i32 = arith.constant 0 : i32
    %c0_i32_0 = arith.constant 0 : i32
    %c0_i32_1 = arith.constant 0 : i32
    return %c0_i32, %c0_i32_0 : i32, i32
  }
  func.func @transform_2(%arg0: i32) -> (i32, i32) {
    %c0_i32 = arith.constant 0 : i32
    %c0_i32_0 = arith.constant 0 : i32
    %c0_i32_1 = arith.constant 0 : i32
    return %c0_i32, %c0_i32_0 : i32, i32
  }
  func.func @transform_3(%arg0: i32) -> (i32, i32) {
    %c0_i32 = arith.constant 0 : i32
    %c0_i32_0 = arith.constant 0 : i32
    %c0_i32_1 = arith.constant 0 : i32
    return %c0_i32, %c0_i32_0 : i32, i32
  }
  func.func @transform_4(%arg0: i32) -> (i32, i32) {
    %c0_i32 = arith.constant 0 : i32
    %c0_i32_0 = arith.constant 0 : i32
    %c0_i32_1 = arith.constant 0 : i32
    return %c0_i32, %c0_i32_0 : i32, i32
  }
  func.func @transform_5(%arg0: i32) -> (i32, i32) {
    %c0_i32 = arith.constant 0 : i32
    %c0_i32_0 = arith.constant 0 : i32
    %c0_i32_1 = arith.constant 0 : i32
    return %c0_i32, %c0_i32_0 : i32, i32
  }
  func.func @transform_6(%arg0: i32) -> (i32, i32) {
    %c0_i32 = arith.constant 0 : i32
    %c0_i32_0 = arith.constant 0 : i32
    %c0_i32_1 = arith.constant 0 : i32
    return %c0_i32, %c0_i32_0 : i32, i32
  }
  func.func @transform_7(%arg0: i32) -> (i32, i32) {
    %c0_i32 = arith.constant 0 : i32
    %c0_i32_0 = arith.constant 0 : i32
    %c0_i32_1 = arith.constant 0 : i32
    return %c0_i32, %c0_i32_0 : i32, i32
  }
  func.func @transform_8(%arg0: i32) -> (i32, i32) {
    %c0_i32 = arith.constant 0 : i32
    %c0_i32_0 = arith.constant 0 : i32
    %c0_i32_1 = arith.constant 0 : i32
    return %c0_i32, %c0_i32_0 : i32, i32
  }
  func.func @transform_9(%arg0: i32) -> (i32, i32) {
    %c0_i32 = arith.constant 0 : i32
    %c0_i32_0 = arith.constant 0 : i32
    %c0_i32_1 = arith.constant 0 : i32
    return %c0_i32, %c0_i32_0 : i32, i32
  }
  func.func @transform_10(%arg0: i32) -> (i32, i32) {
    %c0_i32 = arith.constant 0 : i32
    %c0_i32_0 = arith.constant 0 : i32
    %c0_i32_1 = arith.constant 0 : i32
    return %c0_i32, %c0_i32_0 : i32, i32
  }
}

</mosaic_0001>

<llo_original>
// kernel: tpu_custom_call.1
$region0: #{tpu_custom_call.1}
  #allocation0 [shape = 'u32[]', space=smem, size = 0x4, offset = 0x4, fixed_abs, tag = 'smem constant byte address 0x4 - core index']
  #allocation1 [shape = 'u32[72,128]{1,0:T(1,128)}', space=vmem, size = 0x9000, scoped, tag = 'internal scratch']
  %s0 = inlined_call_operand.vmem [shape: f32[128,64], index: 0, kind: input, shape index: {}]
  %s1 = inlined_call_operand.vmem [shape: f32[128,32], index: 1, kind: input, shape index: {}]
  %s2 = inlined_call_operand.vmem [shape: f32[16,64], index: 2, kind: input, shape index: {}]
  %s3 = inlined_call_operand.vmem [shape: f32[8,32], index: 3, kind: input, shape index: {}]
  %s4 = inlined_call_operand.vmem [shape: f32[64,32], index: 4, kind: input, shape index: {}]
  %s5 = inlined_call_operand.vmem [shape: f32[128,32], index: 5, kind: input, shape index: {}]
  %s6 = inlined_call_operand.vmem [shape: f32[32,80], index: 6, kind: input, shape index: {}]
  %s7 = inlined_call_operand.vmem [shape: f32[64,64], index: 7, kind: input, shape index: {}]
  %s8 = inlined_call_operand.vmem [shape: f32[64,8], index: 8, kind: input, shape index: {}]
  %s9 = inlined_call_operand.vmem [shape: f32[8,128], index: 9, kind: input, shape index: {}]
  %s10 = inlined_call_operand.hbm [shape: f32[16,24], index: 10, kind: output, shape index: {}]
  %s11 = sld [smem:[#allocation0]]
  $region50: #{tpu_custom_call.1} parent=0
    _
  %s13 = ssub.s32 1, %s11
  %s14 = scalar_select 0, %s13, %s11
  $region1: #{tpu_custom_call.1} parent=0
    #allocation2 [shape = 'u8[8192]{0}', space=vmem, size = 0x2000, scoped, tag = 'output window, operand 0, single buffered']
    #allocation3 [shape = 's32[1]{0}', space=sflag, size = 0x4, scoped, tag = 'scoped memory for tpu_custom_call.1']
    %15 = vsyncpa [#allocation3], 0
    // Predicated region
    $region2: #{tpu_custom_call.1} parent=1 // pred_check
      _
    $region3: #{tpu_custom_call.1} parent=1 // pred_check_branch
      %17 = sbr.rel (0) target = $region5
    $region4: #{tpu_custom_call.1} parent=1 // pred_region
      _
    $region5: #{tpu_custom_call.1} parent=1 // pred_fallthru
      _
    // Predicated region
    $region6: #{tpu_custom_call.1} parent=1 // pred_check
      _
    $region7: #{tpu_custom_call.1} parent=1 // pred_check_branch
      %19 = sbr.rel (0) target = $region9
    $region8: #{tpu_custom_call.1} parent=1 // pred_region
      _
    $region9: #{tpu_custom_call.1} parent=1 // pred_fallthru
      _
    // Predicated region
    $region10: #{tpu_custom_call.1} parent=1 // pred_check
      _
    $region11: #{tpu_custom_call.1} parent=1 // pred_check_branch
      %21 = sbr.rel (0) target = $region13
    $region12: #{tpu_custom_call.1} parent=1 // pred_region
      _
    $region13: #{tpu_custom_call.1} parent=1 // pred_fallthru
      _
    // Predicated region
    $region14: #{tpu_custom_call.1} parent=1 // pred_check
      _
    $region15: #{tpu_custom_call.1} parent=1 // pred_check_branch
      %23 = sbr.rel (0) target = $region17
    $region16: #{tpu_custom_call.1} parent=1 // pred_region
      _
    $region17: #{tpu_custom_call.1} parent=1 // pred_fallthru
      _
    // Predicated region
    $region18: #{tpu_custom_call.1} parent=1 // pred_check
      _
    $region19: #{tpu_custom_call.1} parent=1 // pred_check_branch
      %25 = sbr.rel (0) target = $region21
    $region20: #{tpu_custom_call.1} parent=1 // pred_region
      _
    $region21: #{tpu_custom_call.1} parent=1 // pred_fallthru
      _
    // Predicated region
    $region22: #{tpu_custom_call.1} parent=1 // pred_check
      _
    $region23: #{tpu_custom_call.1} parent=1 // pred_check_branch
      %27 = sbr.rel (0) target = $region25
    $region24: #{tpu_custom_call.1} parent=1 // pred_region
      _
    $region25: #{tpu_custom_call.1} parent=1 // pred_fallthru
      _
    // Predicated region
    $region26: #{tpu_custom_call.1} parent=1 // pred_check
      _
    $region27: #{tpu_custom_call.1} parent=1 // pred_check_branch
      %29 = sbr.rel (0) target = $region29
    $region28: #{tpu_custom_call.1} parent=1 // pred_region
      _
    $region29: #{tpu_custom_call.1} parent=1 // pred_fallthru
      _
    // Predicated region
    $region30: #{tpu_custom_call.1} parent=1 // pred_check
      _
    $region31: #{tpu_custom_call.1} parent=1 // pred_check_branch
      %31 = sbr.rel (0) target = $region33
    $region32: #{tpu_custom_call.1} parent=1 // pred_region
      _
    $region33: #{tpu_custom_call.1} parent=1 // pred_fallthru
      _
    // Predicated region
    $region34: #{tpu_custom_call.1} parent=1 // pred_check
      _
    $region35: #{tpu_custom_call.1} parent=1 // pred_check_branch
      %33 = sbr.rel (0) target = $region37
    $region36: #{tpu_custom_call.1} parent=1 // pred_region
      _
    $region37: #{tpu_custom_call.1} parent=1 // pred_fallthru
      _
    // Predicated region
    $region38: #{tpu_custom_call.1} parent=1 // pred_check
      _
    $region39: #{tpu_custom_call.1} parent=1 // pred_check_branch
      %35 = sbr.rel (0) target = $region41
    $region40: #{tpu_custom_call.1} parent=1 // pred_region
      _
    $region41: #{tpu_custom_call.1} parent=1 // pred_fallthru
      _
    %v36 = vld [vmem:[%s9] sm:$0xff]
    %v37 = vld [vmem:[%s0] sm:$0xff]
    %v38 = vld [vmem:[%s0 + $0x8] sm:$0xff]
    %v39 = vld [vmem:[%s0 + $0x10] sm:$0xff]
    %v40 = vld [vmem:[%s0 + $0x18] sm:$0xff]
    %v41 = vld [vmem:[%s0 + $0x20] sm:$0xff]
    %v42 = vld [vmem:[%s0 + $0x28] sm:$0xff]
    %v43 = vld [vmem:[%s0 + $0x30] sm:$0xff]
    %v44 = vld [vmem:[%s0 + $0x38] sm:$0xff]
    %v45 = vld [vmem:[%s0 + $0x40] sm:$0xff]
    %v46 = vld [vmem:[%s0 + $0x48] sm:$0xff]
    %v47 = vld [vmem:[%s0 + $0x50] sm:$0xff]
    %v48 = vld [vmem:[%s0 + $0x58] sm:$0xff]
    %v49 = vld [vmem:[%s0 + $0x60] sm:$0xff]
    %v50 = vld [vmem:[%s0 + $0x68] sm:$0xff]
    %v51 = vld [vmem:[%s0 + $0x70] sm:$0xff]
    %v52 = vld [vmem:[%s0 + $0x78] sm:$0xff]
    %v53 = vld [vmem:[%s4] sm:$0xff]
    %v54 = vld [vmem:[%s4 + $0x8] sm:$0xff]
    %v55 = vld [vmem:[%s4 + $0x10] sm:$0xff]
    %v56 = vld [vmem:[%s4 + $0x18] sm:$0xff]
    %v57 = vld [vmem:[%s4 + $0x20] sm:$0xff]
    %v58 = vld [vmem:[%s4 + $0x28] sm:$0xff]
    %v59 = vld [vmem:[%s4 + $0x30] sm:$0xff]
    %v60 = vld [vmem:[%s4 + $0x38] sm:$0xff]
    %v61 = vperm.slane %v36, 0
    %vm62 = vcmask 523264
    %v64 = vsel %vm62, %v37, 0
    %v67 = vsel %vm62, %v38, 0
    %v70 = vsel %vm62, %v39, 0
    %v73 = vsel %vm62, %v40, 0
    %v76 = vsel %vm62, %v41, 0
    %v79 = vsel %vm62, %v42, 0
    %v82 = vsel %vm62, %v43, 0
    %v85 = vsel %vm62, %v44, 0
    %v88 = vsel %vm62, %v45, 0
    %v91 = vsel %vm62, %v46, 0
    %v94 = vsel %vm62, %v47, 0
    %v97 = vsel %vm62, %v48, 0
    %v100 = vsel %vm62, %v49, 0
    %v103 = vsel %vm62, %v50, 0
    %v106 = vsel %vm62, %v51, 0
    %v109 = vsel %vm62, %v52, 0
    %111 = vmatpush.msra.mxu0 0.0
    %112 = vmatpush.msra.mxu0 0.0
    %113 = vmatpush.msra.mxu0 0.0
    %114 = vmatpush.msra.mxu0 0.0
    %115 = vmatpush.msra.mxu0 0.0
    %116 = vmatpush.msra.mxu0 0.0
    %117 = vmatpush.msra.mxu0 0.0
    %118 = vmatpush.msra.mxu0 0.0
    %119 = vmatpush.msra.mxu0 %v60
    %120 = vmatpush.msra.mxu0 %v59
    %121 = vmatpush.msra.mxu0 %v58
    %122 = vmatpush.msra.mxu0 %v57
    %123 = vmatpush.msra.mxu0 %v56
    %124 = vmatpush.msra.mxu0 %v55
    %125 = vmatpush.msra.mxu0 %v54
    %126 = vmatpush.msra.mxu0 %v53
    %127 = vmatmul.f32.gmra.mxu0 %v64
    %v128 = vpop.f32.mrf.mxu0
    %v129 = vadd.f32 %v61, %v128
    %130 = vmatmul.f32.gmra.mxu0 %v67
    %v131 = vpop.f32.mrf.mxu0
    %v132 = vadd.f32 %v61, %v131
    %133 = vmatmul.f32.gmra.mxu0 %v70
    %v134 = vpop.f32.mrf.mxu0
    %v135 = vadd.f32 %v61, %v134
    %136 = vmatmul.f32.gmra.mxu0 %v73
    %v137 = vpop.f32.mrf.mxu0
    %v138 = vadd.f32 %v61, %v137
    %139 = vmatmul.f32.gmra.mxu0 %v76
    %v140 = vpop.f32.mrf.mxu0
    %v141 = vadd.f32 %v61, %v140
    %142 = vmatmul.f32.gmra.mxu0 %v79
    %v143 = vpop.f32.mrf.mxu0
    %v144 = vadd.f32 %v61, %v143
    %145 = vmatmul.f32.gmra.mxu0 %v82
    %v146 = vpop.f32.mrf.mxu0
    %v147 = vadd.f32 %v61, %v146
    %148 = vmatmul.f32.gmra.mxu0 %v85
    %v149 = vpop.f32.mrf.mxu0
    %v150 = vadd.f32 %v61, %v149
    %151 = vmatmul.f32.gmra.mxu0 %v88
    %v152 = vpop.f32.mrf.mxu0
    %v153 = vadd.f32 %v61, %v152
    %154 = vmatmul.f32.gmra.mxu0 %v91
    %v155 = vpop.f32.mrf.mxu0
    %v156 = vadd.f32 %v61, %v155
    %157 = vmatmul.f32.gmra.mxu0 %v94
    %v158 = vpop.f32.mrf.mxu0
    %v159 = vadd.f32 %v61, %v158
    %160 = vmatmul.f32.gmra.mxu0 %v97
    %v161 = vpop.f32.mrf.mxu0
    %v162 = vadd.f32 %v61, %v161
    %163 = vmatmul.f32.gmra.mxu0 %v100
    %v164 = vpop.f32.mrf.mxu0
    %v165 = vadd.f32 %v61, %v164
    %166 = vmatmul.f32.gmra.mxu0 %v103
    %v167 = vpop.f32.mrf.mxu0
    %v168 = vadd.f32 %v61, %v167
    %169 = vmatmul.f32.gmra.mxu0 %v106
    %v170 = vpop.f32.mrf.mxu0
    %v171 = vadd.f32 %v61, %v170
    %172 = vmatmul.f32.gmra.mxu0 %v109
    %v173 = vpop.f32.mrf.mxu0
    %v174 = vadd.f32 %v61, %v173
    %175 = vdwg.mxu0
    %v176 = vld [vmem:[%s5] sm:$0xff]
    %v177 = vld [vmem:[%s5 + $0x8] sm:$0xff]
    %v178 = vld [vmem:[%s5 + $0x10] sm:$0xff]
    %v179 = vld [vmem:[%s5 + $0x18] sm:$0xff]
    %v180 = vld [vmem:[%s5 + $0x20] sm:$0xff]
    %v181 = vld [vmem:[%s5 + $0x28] sm:$0xff]
    %v182 = vld [vmem:[%s5 + $0x30] sm:$0xff]
    %v183 = vld [vmem:[%s5 + $0x38] sm:$0xff]
    %v184 = vld [vmem:[%s5 + $0x40] sm:$0xff]
    %v185 = vld [vmem:[%s5 + $0x48] sm:$0xff]
    %v186 = vld [vmem:[%s5 + $0x50] sm:$0xff]
    %v187 = vld [vmem:[%s5 + $0x58] sm:$0xff]
    %v188 = vld [vmem:[%s5 + $0x60] sm:$0xff]
    %v189 = vld [vmem:[%s5 + $0x68] sm:$0xff]
    %v190 = vld [vmem:[%s5 + $0x70] sm:$0xff]
    %v191 = vld [vmem:[%s5 + $0x78] sm:$0xff]
    %v192 = vld [vmem:[%s3] sm:$0xff]
    %v193 = vperm.slane %v36, 1
    %vm194 = vcmask 261120
    %v196 = vsel %vm194, %v192, 0
    %198 = vmatpush.msra.mxu0 0.0
    %199 = vmatpush.msra.mxu0 0.0
    %200 = vmatpush.msra.mxu0 0.0
    %201 = vmatpush.msra.mxu0 0.0
    %202 = vmatpush.msra.mxu0 0.0
    %203 = vmatpush.msra.mxu0 0.0
    %204 = vmatpush.msra.mxu0 0.0
    %205 = vmatpush.msra.mxu0 0.0
    %206 = vmatpush.msra.mxu0 0.0
    %207 = vmatpush.msra.mxu0 0.0
    %208 = vmatpush.msra.mxu0 0.0
    %209 = vmatpush.msra.mxu0 0.0
    %210 = vmatpush.msra.mxu0 %v179
    %211 = vmatpush.msra.mxu0 %v178
    %212 = vmatpush.msra.mxu0 %v177
    %213 = vmatpush.msra.mxu0 %v176
    %214 = vmatmul.f32.gmra.mxu0 %v196
    %v215 = vpop.f32.mrf.mxu0
    %v216 = vadd.f32 %v193, %v215
    %217 = vdwg.mxu0
    %v218 = vld [vmem:[%s1] sm:$0xff]
    %v219 = vld [vmem:[%s1 + $0x8] sm:$0xff]
    %v220 = vld [vmem:[%s1 + $0x10] sm:$0xff]
    %v221 = vld [vmem:[%s1 + $0x18] sm:$0xff]
    %v222 = vld [vmem:[%s1 + $0x20] sm:$0xff]
    %v223 = vld [vmem:[%s1 + $0x28] sm:$0xff]
    %v224 = vld [vmem:[%s1 + $0x30] sm:$0xff]
    %v225 = vld [vmem:[%s1 + $0x38] sm:$0xff]
    %v226 = vld [vmem:[%s1 + $0x40] sm:$0xff]
    %v227 = vld [vmem:[%s1 + $0x48] sm:$0xff]
    %v228 = vld [vmem:[%s1 + $0x50] sm:$0xff]
    %v229 = vld [vmem:[%s1 + $0x58] sm:$0xff]
    %v230 = vld [vmem:[%s1 + $0x60] sm:$0xff]
    %v231 = vld [vmem:[%s1 + $0x68] sm:$0xff]
    %v232 = vld [vmem:[%s1 + $0x70] sm:$0xff]
    %v233 = vld [vmem:[%s1 + $0x78] sm:$0xff]
    %v234 = vadd.f32 %v129, %v218
    %v235 = vadd.f32 %v132, %v219
    %v236 = vadd.f32 %v135, %v220
    %v237 = vadd.f32 %v138, %v221
    %v238 = vadd.f32 %v141, %v222
    %v239 = vadd.f32 %v144, %v223
    %v240 = vadd.f32 %v147, %v224
    %v241 = vadd.f32 %v150, %v225
    %v242 = vadd.f32 %v153, %v226
    %v243 = vadd.f32 %v156, %v227
    %v244 = vadd.f32 %v159, %v228
    %v245 = vadd.f32 %v162, %v229
    %v246 = vadd.f32 %v165, %v230
    %v247 = vadd.f32 %v168, %v231
    %v248 = vadd.f32 %v171, %v232
    %v249 = vadd.f32 %v174, %v233
    %v250 = vperm.slane %v36, 2
    %v252 = vsel %vm194, %v234, 0
    %v255 = vsel %vm194, %v235, 0
    %v258 = vsel %vm194, %v236, 0
    %v261 = vsel %vm194, %v237, 0
    %v264 = vsel %vm194, %v238, 0
    %v267 = vsel %vm194, %v239, 0
    %v270 = vsel %vm194, %v240, 0
    %v273 = vsel %vm194, %v241, 0
    %v276 = vsel %vm194, %v242, 0
    %v279 = vsel %vm194, %v243, 0
    %v282 = vsel %vm194, %v244, 0
    %v285 = vsel %vm194, %v245, 0
    %v288 = vsel %vm194, %v246, 0
    %v291 = vsel %vm194, %v247, 0
    %v294 = vsel %vm194, %v248, 0
    %v297 = vsel %vm194, %v249, 0
    %299 = vmatpush.msra.mxu0 0.0
    %300 = vmatpush.msra.mxu0 0.0
    %301 = vmatpush.msra.mxu0 0.0
    %302 = vmatpush.msra.mxu0 0.0
    %303 = vmatpush.msra.mxu0 0.0
    %304 = vmatpush.msra.mxu0 0.0
    %305 = vmatpush.msra.mxu0 0.0
    %306 = vmatpush.msra.mxu0 0.0
    %307 = vmatpush.msra.mxu0 0.0
    %308 = vmatpush.msra.mxu0 0.0
    %309 = vmatpush.msra.mxu0 0.0
    %310 = vmatpush.msra.mxu0 0.0
    %311 = vmatpush.msra.mxu0 %v183
    %312 = vmatpush.msra.mxu0 %v182
    %313 = vmatpush.msra.mxu0 %v181
    %314 = vmatpush.msra.mxu0 %v180
    %315 = vmatmul.f32.gmra.mxu0 %v252
    %v316 = vpop.f32.mrf.mxu0
    %v317 = vadd.f32 %v250, %v316
    %318 = vmatmul.f32.gmra.mxu0 %v255
    %v319 = vpop.f32.mrf.mxu0
    %v320 = vadd.f32 %v250, %v319
    %321 = vmatmul.f32.gmra.mxu0 %v258
    %v322 = vpop.f32.mrf.mxu0
    %v323 = vadd.f32 %v250, %v322
    %324 = vmatmul.f32.gmra.mxu0 %v261
    %v325 = vpop.f32.mrf.mxu0
    %v326 = vadd.f32 %v250, %v325
    %327 = vmatmul.f32.gmra.mxu0 %v264
    %v328 = vpop.f32.mrf.mxu0
    %v329 = vadd.f32 %v250, %v328
    %330 = vmatmul.f32.gmra.mxu0 %v267
    %v331 = vpop.f32.mrf.mxu0
    %v332 = vadd.f32 %v250, %v331
    %333 = vmatmul.f32.gmra.mxu0 %v270
    %v334 = vpop.f32.mrf.mxu0
    %v335 = vadd.f32 %v250, %v334
    %336 = vmatmul.f32.gmra.mxu0 %v273
    %v337 = vpop.f32.mrf.mxu0
    %v338 = vadd.f32 %v250, %v337
    %339 = vmatmul.f32.gmra.mxu0 %v276
    %v340 = vpop.f32.mrf.mxu0
    %v341 = vadd.f32 %v250, %v340
    %342 = vmatmul.f32.gmra.mxu0 %v279
    %v343 = vpop.f32.mrf.mxu0
    %v344 = vadd.f32 %v250, %v343
    %345 = vmatmul.f32.gmra.mxu0 %v282
    %v346 = vpop.f32.mrf.mxu0
    %v347 = vadd.f32 %v250, %v346
    %348 = vmatmul.f32.gmra.mxu0 %v285
    %v349 = vpop.f32.mrf.mxu0
    %v350 = vadd.f32 %v250, %v349
    %351 = vmatmul.f32.gmra.mxu0 %v288
    %v352 = vpop.f32.mrf.mxu0
    %v353 = vadd.f32 %v250, %v352
    %354 = vmatmul.f32.gmra.mxu0 %v291
    %v355 = vpop.f32.mrf.mxu0
    %v356 = vadd.f32 %v250, %v355
    %357 = vmatmul.f32.gmra.mxu0 %v294
    %v358 = vpop.f32.mrf.mxu0
    %v359 = vadd.f32 %v250, %v358
    %360 = vmatmul.f32.gmra.mxu0 %v297
    %v361 = vpop.f32.mrf.mxu0
    %v362 = vadd.f32 %v250, %v361
    %363 = vdwg.mxu0
    %v364 = vperm.slane %v36, 3
    %v366 = vsel %vm194, %v129, 0
    %v369 = vsel %vm194, %v132, 0
    %v372 = vsel %vm194, %v135, 0
    %v375 = vsel %vm194, %v138, 0
    %v378 = vsel %vm194, %v141, 0
    %v381 = vsel %vm194, %v144, 0
    %v384 = vsel %vm194, %v147, 0
    %v387 = vsel %vm194, %v150, 0
    %v390 = vsel %vm194, %v153, 0
    %v393 = vsel %vm194, %v156, 0
    %v396 = vsel %vm194, %v159, 0
    %v399 = vsel %vm194, %v162, 0
    %v402 = vsel %vm194, %v165, 0
    %v405 = vsel %vm194, %v168, 0
    %v408 = vsel %vm194, %v171, 0
    %v411 = vsel %vm194, %v174, 0
    %413 = vmatpush.msra.mxu0 0.0
    %414 = vmatpush.msra.mxu0 0.0
    %415 = vmatpush.msra.mxu0 0.0
    %416 = vmatpush.msra.mxu0 0.0
    %417 = vmatpush.msra.mxu0 0.0
    %418 = vmatpush.msra.mxu0 0.0
    %419 = vmatpush.msra.mxu0 0.0
    %420 = vmatpush.msra.mxu0 0.0
    %421 = vmatpush.msra.mxu0 0.0
    %422 = vmatpush.msra.mxu0 0.0
    %423 = vmatpush.msra.mxu0 0.0
    %424 = vmatpush.msra.mxu0 0.0
    %425 = vmatpush.msra.mxu0 %v187
    %426 = vmatpush.msra.mxu0 %v186
    %427 = vmatpush.msra.mxu0 %v185
    %428 = vmatpush.msra.mxu0 %v184
    %429 = vmatmul.f32.gmra.mxu0 %v366
    %v430 = vpop.f32.mrf.mxu0
    %v431 = vadd.f32 %v364, %v430
    %432 = vmatmul.f32.gmra.mxu0 %v369
    %v433 = vpop.f32.mrf.mxu0
    %v434 = vadd.f32 %v364, %v433
    %435 = vmatmul.f32.gmra.mxu0 %v372
    %v436 = vpop.f32.mrf.mxu0
    %v437 = vadd.f32 %v364, %v436
    %438 = vmatmul.f32.gmra.mxu0 %v375
    %v439 = vpop.f32.mrf.mxu0
    %v440 = vadd.f32 %v364, %v439
    %441 = vmatmul.f32.gmra.mxu0 %v378
    %v442 = vpop.f32.mrf.mxu0
    %v443 = vadd.f32 %v364, %v442
    %444 = vmatmul.f32.gmra.mxu0 %v381
    %v445 = vpop.f32.mrf.mxu0
    %v446 = vadd.f32 %v364, %v445
    %447 = vmatmul.f32.gmra.mxu0 %v384
    %v448 = vpop.f32.mrf.mxu0
    %v449 = vadd.f32 %v364, %v448
    %450 = vmatmul.f32.gmra.mxu0 %v387
    %v451 = vpop.f32.mrf.mxu0
    %v452 = vadd.f32 %v364, %v451
    %453 = vmatmul.f32.gmra.mxu0 %v390
    %v454 = vpop.f32.mrf.mxu0
    %v455 = vadd.f32 %v364, %v454
    %456 = vmatmul.f32.gmra.mxu0 %v393
    %v457 = vpop.f32.mrf.mxu0
    %v458 = vadd.f32 %v364, %v457
    %459 = vmatmul.f32.gmra.mxu0 %v396
    %v460 = vpop.f32.mrf.mxu0
    %v461 = vadd.f32 %v364, %v460
    %462 = vmatmul.f32.gmra.mxu0 %v399
    %v463 = vpop.f32.mrf.mxu0
    %v464 = vadd.f32 %v364, %v463
    %465 = vmatmul.f32.gmra.mxu0 %v402
    %v466 = vpop.f32.mrf.mxu0
    %v467 = vadd.f32 %v364, %v466
    %468 = vmatmul.f32.gmra.mxu0 %v405
    %v469 = vpop.f32.mrf.mxu0
    %v470 = vadd.f32 %v364, %v469
    %471 = vmatmul.f32.gmra.mxu0 %v408
    %v472 = vpop.f32.mrf.mxu0
    %v473 = vadd.f32 %v364, %v472
    %474 = vmatmul.f32.gmra.mxu0 %v411
    %v475 = vpop.f32.mrf.mxu0
    %v476 = vadd.f32 %v364, %v475
    %477 = vdwg.mxu0
    %v478 = vld [vmem:[%s2] sm:$0xff]
    %v479 = vld [vmem:[%s2 + $0x8] sm:$0xff]
    %v481 = vsel %vm194, %v216, 0
    %v484 = vsel %vm194, %v317, 0
    %v487 = vsel %vm194, %v320, 0
    %v490 = vsel %vm194, %v323, 0
    %v493 = vsel %vm194, %v326, 0
    %v496 = vsel %vm194, %v329, 0
    %v499 = vsel %vm194, %v332, 0
    %v502 = vsel %vm194, %v335, 0
    %v505 = vsel %vm194, %v338, 0
    %507 = vmatpush.xpose.msra.mxu0 0.0
    %508 = vmatpush.xpose.msra.mxu0 0.0
    %509 = vmatpush.xpose.msra.mxu0 0.0
    %510 = vmatpush.xpose.msra.mxu0 0.0
    %511 = vmatpush.xpose.msra.mxu0 0.0
    %512 = vmatpush.xpose.msra.mxu0 0.0
    %513 = vmatpush.xpose.msra.mxu0 0.0
    %514 = vmatpush.xpose.msra.mxu0 0.0
    %515 = vmatpush.xpose.msra.mxu0 %v505
    %516 = vmatpush.xpose.msra.mxu0 %v502
    %517 = vmatpush.xpose.msra.mxu0 %v499
    %518 = vmatpush.xpose.msra.mxu0 %v496
    %519 = vmatpush.xpose.msra.mxu0 %v493
    %520 = vmatpush.xpose.msra.mxu0 %v490
    %521 = vmatpush.xpose.msra.mxu0 %v487
    %522 = vmatpush.xpose.msra.mxu0 %v484
    %523 = vmatmul.f32.gmra.mxu0 %v481
    %v524 = vpop.f32.mrf.mxu0
    %v525 = vadd.f32 %v478, %v524
    %526 = vdwg.mxu0
    %v527 = vsel %vm62, %v525, -inf
    %528 = vmax.xlane.f32.xlu0 %v527
    %v529 = vpop.xlane.xlu0 %528
    %v530 = vsub.f32 %v525, %v529
    %v531 = vmul.f32 %v530, 1.442695
    %v532 = vpow.pop %v531
    %v533 = vsel %vm62, %v532, 0.0
    %534 = vadd.xlane.f32.xlu0 %v533
    %v535 = vpop.xlane.xlu0 %534
    %v536 = vrcp.pop %v535
    %v537 = vmul.f32 %v532, %v536
    %v539 = vsel %vm62, %v537, 0
    %541 = vmatpush.msra.mxu0 0.0
    %542 = vmatpush.msra.mxu0 0.0
    %543 = vmatpush.msra.mxu0 0.0
    %544 = vmatpush.msra.mxu0 0.0
    %545 = vmatpush.msra.mxu0 0.0
    %546 = vmatpush.msra.mxu0 0.0
    %547 = vmatpush.msra.mxu0 0.0
    %548 = vmatpush.msra.mxu0 0.0
    %549 = vmatpush.msra.mxu0 %v452
    %550 = vmatpush.msra.mxu0 %v449
    %551 = vmatpush.msra.mxu0 %v446
    %552 = vmatpush.msra.mxu0 %v443
    %553 = vmatpush.msra.mxu0 %v440
    %554 = vmatpush.msra.mxu0 %v437
    %555 = vmatpush.msra.mxu0 %v434
    %556 = vmatpush.msra.mxu0 %v431
    %557 = vmatmul.f32.gmra.mxu0 %v539
    %v558 = vpop.f32.mrf.mxu0
    %v559 = vadd.f32 0.0, %v558
    %560 = vdwg.mxu0
    %v562 = vsel %vm194, %v341, 0
    %v565 = vsel %vm194, %v344, 0
    %v568 = vsel %vm194, %v347, 0
    %v571 = vsel %vm194, %v350, 0
    %v574 = vsel %vm194, %v353, 0
    %v577 = vsel %vm194, %v356, 0
    %v580 = vsel %vm194, %v359, 0
    %v583 = vsel %vm194, %v362, 0
    %585 = vmatpush.xpose.msra.mxu0 0.0
    %586 = vmatpush.xpose.msra.mxu0 0.0
    %587 = vmatpush.xpose.msra.mxu0 0.0
    %588 = vmatpush.xpose.msra.mxu0 0.0
    %589 = vmatpush.xpose.msra.mxu0 0.0
    %590 = vmatpush.xpose.msra.mxu0 0.0
    %591 = vmatpush.xpose.msra.mxu0 0.0
    %592 = vmatpush.xpose.msra.mxu0 0.0
    %593 = vmatpush.xpose.msra.mxu0 %v583
    %594 = vmatpush.xpose.msra.mxu0 %v580
    %595 = vmatpush.xpose.msra.mxu0 %v577
    %596 = vmatpush.xpose.msra.mxu0 %v574
    %597 = vmatpush.xpose.msra.mxu0 %v571
    %598 = vmatpush.xpose.msra.mxu0 %v568
    %599 = vmatpush.xpose.msra.mxu0 %v565
    %600 = vmatpush.xpose.msra.mxu0 %v562
    %601 = vmatmul.f32.gmra.mxu0 %v481
    %v602 = vpop.f32.mrf.mxu0
    %v603 = vadd.f32 %v479, %v602
    %604 = vdwg.mxu0
    %v605 = vsel %vm62, %v603, -inf
    %606 = vmax.xlane.f32.xlu0 %v605
    %v607 = vpop.xlane.xlu0 %606
    %v608 = vsub.f32 %v603, %v607
    %v609 = vmul.f32 %v608, 1.442695
    %v610 = vpow.pop %v609
    %v611 = vsel %vm62, %v610, 0.0
    %612 = vadd.xlane.f32.xlu0 %v611
    %v613 = vpop.xlane.xlu0 %612
    %v614 = vrcp.pop %v613
    %v615 = vmul.f32 %v610, %v614
    %v617 = vsel %vm62, %v615, 0
    %619 = vmatpush.msra.mxu0 0.0
    %620 = vmatpush.msra.mxu0 0.0
    %621 = vmatpush.msra.mxu0 0.0
    %622 = vmatpush.msra.mxu0 0.0
    %623 = vmatpush.msra.mxu0 0.0
    %624 = vmatpush.msra.mxu0 0.0
    %625 = vmatpush.msra.mxu0 0.0
    %626 = vmatpush.msra.mxu0 0.0
    %627 = vmatpush.msra.mxu0 %v476
    %628 = vmatpush.msra.mxu0 %v473
    %629 = vmatpush.msra.mxu0 %v470
    %630 = vmatpush.msra.mxu0 %v467
    %631 = vmatpush.msra.mxu0 %v464
    %632 = vmatpush.msra.mxu0 %v461
    %633 = vmatpush.msra.mxu0 %v458
    %634 = vmatpush.msra.mxu0 %v455
    %635 = vmatmul.f32.gmra.mxu0 %v617
    %v636 = vpop.f32.mrf.mxu0
    %v637 = vadd.f32 0.0, %v636
    %638 = vdwg.mxu0
    %v639 = vperm.slane %v36, 4
    %v641 = vsel %vm194, %v559, 0
    %v644 = vsel %vm194, %v637, 0
    %646 = vmatpush.msra.mxu0 0.0
    %647 = vmatpush.msra.mxu0 0.0
    %648 = vmatpush.msra.mxu0 0.0
    %649 = vmatpush.msra.mxu0 0.0
    %650 = vmatpush.msra.mxu0 0.0
    %651 = vmatpush.msra.mxu0 0.0
    %652 = vmatpush.msra.mxu0 0.0
    %653 = vmatpush.msra.mxu0 0.0
    %654 = vmatpush.msra.mxu0 0.0
    %655 = vmatpush.msra.mxu0 0.0
    %656 = vmatpush.msra.mxu0 0.0
    %657 = vmatpush.msra.mxu0 0.0
    %658 = vmatpush.msra.mxu0 %v191
    %659 = vmatpush.msra.mxu0 %v190
    %660 = vmatpush.msra.mxu0 %v189
    %661 = vmatpush.msra.mxu0 %v188
    %662 = vmatmul.f32.gmra.mxu0 %v641
    %v663 = vpop.f32.mrf.mxu0
    %v664 = vadd.f32 %v639, %v663
    %665 = vmatmul.f32.gmra.mxu0 %v644
    %v666 = vpop.f32.mrf.mxu0
    %v667 = vadd.f32 %v639, %v666
    %668 = vdwg.mxu0
    %v669 = vld [vmem:[%s6] sm:$0xff]
    %v670 = vld [vmem:[%s6 + $0x8] sm:$0xff]
    %v671 = vld [vmem:[%s6 + $0x10] sm:$0xff]
    %v672 = vld [vmem:[%s6 + $0x18] sm:$0xff]
    %v673 = vperm.slane %v36, 5
    %v675 = vsel %vm194, %v664, 0
    %v678 = vsel %vm194, %v667, 0
    %680 = vmatpush.msra.mxu0 0.0
    %681 = vmatpush.msra.mxu0 0.0
    %682 = vmatpush.msra.mxu0 0.0
    %683 = vmatpush.msra.mxu0 0.0
    %684 = vmatpush.msra.mxu0 0.0
    %685 = vmatpush.msra.mxu0 0.0
    %686 = vmatpush.msra.mxu0 0.0
    %687 = vmatpush.msra.mxu0 0.0
    %688 = vmatpush.msra.mxu0 0.0
    %689 = vmatpush.msra.mxu0 0.0
    %690 = vmatpush.msra.mxu0 0.0
    %691 = vmatpush.msra.mxu0 0.0
    %692 = vmatpush.msra.mxu0 %v672
    %693 = vmatpush.msra.mxu0 %v671
    %694 = vmatpush.msra.mxu0 %v670
    %695 = vmatpush.msra.mxu0 %v669
    %696 = vmatmul.f32.gmra.mxu0 %v675
    %v697 = vpop.f32.mrf.mxu0
    %v698 = vadd.f32 %v673, %v697
    %699 = vmatmul.f32.gmra.mxu0 %v678
    %v700 = vpop.f32.mrf.mxu0
    %v701 = vadd.f32 %v673, %v700
    %702 = vdwg.mxu0
    %v703 = vmax.f32 %v698, 0.0
    %v704 = vmax.f32 %v701, 0.0
    %v705 = vld [vmem:[%s7] sm:$0xff]
    %v706 = vld [vmem:[%s7 + $0x8] sm:$0xff]
    %v707 = vld [vmem:[%s7 + $0x10] sm:$0xff]
    %v708 = vld [vmem:[%s7 + $0x18] sm:$0xff]
    %v709 = vld [vmem:[%s7 + $0x20] sm:$0xff]
    %v710 = vld [vmem:[%s7 + $0x28] sm:$0xff]
    %v711 = vld [vmem:[%s7 + $0x30] sm:$0xff]
    %v712 = vld [vmem:[%s7 + $0x38] sm:$0xff]
    %v713 = vperm.slane %v36, 6
    %716 = vrot.lane.b32.xlu0 %v703, 112
    %v717 = vpop.permute.xlu0 %716
    %718 = vrot.lane.b32.xlu0 %v704, 112
    %v719 = vpop.permute.xlu0 %718
    %v720 = vsel %vm62, %v717, 0
    %v722 = vsel %vm62, %v719, 0
    %724 = vmatpush.msra.mxu0 0.0
    %725 = vmatpush.msra.mxu0 0.0
    %726 = vmatpush.msra.mxu0 0.0
    %727 = vmatpush.msra.mxu0 0.0
    %728 = vmatpush.msra.mxu0 0.0
    %729 = vmatpush.msra.mxu0 0.0
    %730 = vmatpush.msra.mxu0 0.0
    %731 = vmatpush.msra.mxu0 0.0
    %732 = vmatpush.msra.mxu0 %v712
    %733 = vmatpush.msra.mxu0 %v711
    %734 = vmatpush.msra.mxu0 %v710
    %735 = vmatpush.msra.mxu0 %v709
    %736 = vmatpush.msra.mxu0 %v708
    %737 = vmatpush.msra.mxu0 %v707
    %738 = vmatpush.msra.mxu0 %v706
    %739 = vmatpush.msra.mxu0 %v705
    %740 = vmatmul.f32.gmra.mxu0 %v720
    %v741 = vpop.f32.mrf.mxu0
    %v742 = vadd.f32 %v713, %v741
    %743 = vmatmul.f32.gmra.mxu0 %v722
    %v744 = vpop.f32.mrf.mxu0
    %v745 = vadd.f32 %v713, %v744
    %746 = vdwg.mxu0
    %v747 = vmax.f32 %v742, 0.0
    %v748 = vmax.f32 %v745, 0.0
    %v749 = vld [vmem:[%s8] sm:$0xff]
    %v750 = vld [vmem:[%s8 + $0x8] sm:$0xff]
    %v751 = vld [vmem:[%s8 + $0x10] sm:$0xff]
    %v752 = vld [vmem:[%s8 + $0x18] sm:$0xff]
    %v753 = vld [vmem:[%s8 + $0x20] sm:$0xff]
    %v754 = vld [vmem:[%s8 + $0x28] sm:$0xff]
    %v755 = vld [vmem:[%s8 + $0x30] sm:$0xff]
    %v756 = vld [vmem:[%s8 + $0x38] sm:$0xff]
    %v757 = vperm.slane %v36, 7
    %v759 = vsel %vm62, %v747, 0
    %v762 = vsel %vm62, %v748, 0
    %764 = vmatpush.msra.mxu0 0.0
    %765 = vmatpush.msra.mxu0 0.0
    %766 = vmatpush.msra.mxu0 0.0
    %767 = vmatpush.msra.mxu0 0.0
    %768 = vmatpush.msra.mxu0 0.0
    %769 = vmatpush.msra.mxu0 0.0
    %770 = vmatpush.msra.mxu0 0.0
    %771 = vmatpush.msra.mxu0 0.0
    %772 = vmatpush.msra.mxu0 %v756
    %773 = vmatpush.msra.mxu0 %v755
    %774 = vmatpush.msra.mxu0 %v754
    %775 = vmatpush.msra.mxu0 %v753
    %776 = vmatpush.msra.mxu0 %v752
    %777 = vmatpush.msra.mxu0 %v751
    %778 = vmatpush.msra.mxu0 %v750
    %779 = vmatpush.msra.mxu0 %v749
    %780 = vmatmul.f32.gmra.mxu0 %v759
    %v781 = vpop.f32.mrf.mxu0
    %v782 = vadd.f32 %v757, %v781
    %783 = vmatmul.f32.gmra.mxu0 %v762
    %v784 = vpop.f32.mrf.mxu0
    %v785 = vadd.f32 %v757, %v784
    %786 = vdwg.mxu0
    %v787 = vxor.u32 %v782, 2147483648
    %v788 = vxor.u32 %v785, 2147483648
    %v789 = vmul.f32 %v787, 1.442695
    %v790 = vpow.pop %v789
    %v791 = vmul.f32 %v788, 1.442695
    %v792 = vpow.pop %v791
    %v793 = vadd.f32 %v790, 1.0
    %v794 = vadd.f32 %v792, 1.0
    %v795 = vrcp.pop %v793
    %v796 = vmul.f32 %v793, %v795
    %v797 = vsub.f32 1.0, %v796
    %v798 = vmul.f32 %v795, %v797
    %v799 = vadd.f32 %v795, %v798
    %vm800 = vweird.f32 %v793
    %vm801 = vweird.f32 %v795
    %vm802 = vmor %vm800, %vm801
    %v803 = vsel %vm802, %v795, %v799
    %v804 = vand.u32 2147483647, %v793
    %vm805 = vcmp.eq.f32.partialorder %v804, 8.507059e+37
    %v806 = vand.u32 %v793, 2147483648
    %v807 = vor.u32 1.1754944e-38, %v806
    %v808 = vsel %vm805, %v807, %v803
    %v809 = vmul.f32 1.0, %v808
    %v810 = vrcp.pop %v794
    %v811 = vmul.f32 %v794, %v810
    %v812 = vsub.f32 1.0, %v811
    %v813 = vmul.f32 %v810, %v812
    %v814 = vadd.f32 %v810, %v813
    %vm815 = vweird.f32 %v794
    %vm816 = vweird.f32 %v810
    %vm817 = vmor %vm815, %vm816
    %v818 = vsel %vm817, %v810, %v814
    %v819 = vand.u32 2147483647, %v794
    %vm820 = vcmp.eq.f32.partialorder %v819, 8.507059e+37
    %v821 = vand.u32 %v794, 2147483648
    %v822 = vor.u32 1.1754944e-38, %v821
    %v823 = vsel %vm820, %v822, %v818
    %v824 = vmul.f32 1.0, %v823
    %827 = vrot.lane.b32.xlu0 %v809, 16
    %v828 = vpop.permute.xlu0 %827
    %829 = vrot.lane.b32.xlu0 %v824, 16
    %v830 = vpop.permute.xlu0 %829
    %vm833 = vcmask 130048
    %v834 = vsel %vm833, %v698, %v828
    %v835 = vsel %vm833, %v701, %v830
    %vm836 = vcmask 195584
    %837 = vst.msk [vmem:[#allocation2] sm:$0xff] %vm836, %v834
    %838 = vst.msk [vmem:[#allocation2 + $0x8] sm:$0xff] %vm836, %v835
    // Predicated region
    $region42: #{tpu_custom_call.1} parent=1 // pred_check
      _
    $region43: #{tpu_custom_call.1} parent=1 // pred_check_branch
      %840 = sbr.rel (0) target = $region45
    $region44: #{tpu_custom_call.1} parent=1 // pred_region
      %842 = vsyncadd [#allocation3], 0
      %s843 = sshll.u32 [#allocation2], 4
      %s844 = int_to_ptr.vmem [resolvable:$true] %s843
      %s845 = sshll.u32 %s10, 4
      %s846 = int_to_ptr.hbm [resolvable:$true] %s845
      %851 = dma.vmem_to_hbm [thread:$0]  %s844, 256, %s846, [#allocation3], 128, 128, 8
    $region45: #{tpu_custom_call.1} parent=1 // pred_fallthru
      _
    // Predicated region
    $region46: #{tpu_custom_call.1} parent=1 // pred_check
      _
    $region47: #{tpu_custom_call.1} parent=1 // pred_check_branch
      %853 = sbr.rel (0) target = $region49
    $region48: #{tpu_custom_call.1} parent=1 // pred_region
      %855 = dma.done [#allocation3], 256
    $region49: #{tpu_custom_call.1} parent=1 // pred_fallthru
      _
    %856 = vsyncpa [#allocation3], 1

</llo_original>
